<compile_context>
chip_gen: v7x
topology: tpu7x:2x2x1
jax: 0.10.0
libtpu: 0.0.40
codegen_flags: <defaults>
</compile_context>

<pallas_src>
import functools

import jax
import jax.numpy as jnp
from jax import lax
from jax.experimental import pallas as pl
from jax.experimental.pallas import tpu as pltpu

_LOG_SQRT_2PI = 0.9189385332046727  # log(sqrt(2*pi))
_LANES = 128


def _elbo_kernel(param_ref, y_ref, eps_mu_ref, eps_lv_ref, out_ref,
                 *, n_valid, d):
    # ---- scalar parameter math (SMEM, done once) -------------------------
    mu_mu = param_ref[0]
    mu_logvar = param_ref[1]
    logvar_mu = param_ref[2]
    logvar_logvar = param_ref[3]

    mu_sd = jnp.exp(0.5 * mu_logvar)
    logvar_sd = jnp.exp(0.5 * logvar_logvar)

    # ---- sufficient statistics of y (computed once, tiny) ----------------
    y = y_ref[...]                       # (1, D) in VMEM
    sum_y = jnp.sum(y)
    sum_y2 = jnp.sum(y * y)

    d_f = float(d)

    # ---- lane-dense per-sample path: everything is (R, 128) --------------
    eps_mu = eps_mu_ref[...]             # (R, 128)
    eps_lv = eps_lv_ref[...]             # (R, 128)

    mu = eps_mu * mu_sd + mu_mu          # reparameterized samples
    logvar = eps_lv * logvar_sd + logvar_mu
    inv_var = jnp.exp(-logvar)           # one EUP op per sample (no divide)

    # sum_d (y_d - mu)^2 = sum_y2 - 2*mu*sum_y + D*mu^2  (sufficient stats)
    quad = sum_y2 + mu * (d_f * mu - 2.0 * sum_y)

    # per-sample (penalty_i - lls_sum_i), scalar constants hoisted out:
    #   penalty_i = -0.5*(eps_mu^2 + eps_lv^2) + const_pen
    #   lls_sum_i = -0.5*inv_var*quad - 0.5*D*logvar + const_lls
    per_sample = (-0.5 * (eps_mu * eps_mu + eps_lv * eps_lv)
                  + 0.5 * inv_var * quad
                  + (0.5 * d_f) * logvar)

    # mask out padded samples (only if padding was actually added)
    r, lanes = per_sample.shape
    if n_valid != r * lanes:
        row = lax.broadcasted_iota(jnp.int32, per_sample.shape, 0)
        lane = lax.broadcasted_iota(jnp.int32, per_sample.shape, 1)
        idx = row * lanes + lane
        per_sample = jnp.where(idx < n_valid, per_sample, 0.0)

    # single fused mean + hoisted scalar constants
    total = jnp.sum(per_sample)
    const = (-0.5 * mu_logvar - 0.5 * logvar_logvar
             + (d_f - 2.0) * _LOG_SQRT_2PI)
    out_ref[0, 0] = total * (1.0 / float(n_valid)) + const


def model_forward(param, y, eps_mu, eps_logvar):
    """param: (4,), y: (D,), eps_mu/eps_logvar: (N,) or (N,1). Scalar f32 out."""
    param = param.astype(jnp.float32)
    y2d = y.reshape(1, -1).astype(jnp.float32)
    d = y2d.shape[1]

    eps_mu = eps_mu.reshape(-1).astype(jnp.float32)
    eps_lv = eps_logvar.reshape(-1).astype(jnp.float32)
    n = eps_mu.shape[0]

    n_pad = ((n + _LANES - 1) // _LANES) * _LANES
    pad = n_pad - n
    if pad:
        eps_mu = jnp.pad(eps_mu, (0, pad))
        eps_lv = jnp.pad(eps_lv, (0, pad))
    r = n_pad // _LANES
    eps_mu2 = eps_mu.reshape(r, _LANES)   # lane-dense: samples on lane axis
    eps_lv2 = eps_lv.reshape(r, _LANES)

    kernel = functools.partial(_elbo_kernel, n_valid=n, d=d)
    out = pl.pallas_call(
        kernel,
        out_shape=jax.ShapeDtypeStruct((1, 1), jnp.float32),
        in_specs=[
            pl.BlockSpec(memory_space=pltpu.SMEM),   # param (4,)
            pl.BlockSpec(memory_space=pltpu.VMEM),   # y (1, D)
            pl.BlockSpec(memory_space=pltpu.VMEM),   # eps_mu (R, 128)
            pl.BlockSpec(memory_space=pltpu.VMEM),   # eps_logvar (R, 128)
        ],
        out_specs=pl.BlockSpec(memory_space=pltpu.SMEM),
    )(param, y2d, eps_mu2, eps_lv2)
    return out[0, 0]


def _reference(param, y, eps_mu, eps_logvar):
    """Direct (non-sufficient-statistics) form matching torch semantics."""
    mu_mu, mu_logvar, logvar_mu, logvar_logvar = param
    mu_sd = jnp.exp(0.5 * mu_logvar)
    logvar_sd = jnp.exp(0.5 * logvar_logvar)
    mu = eps_mu * mu_sd + mu_mu                 # (N,)
    logvar = eps_logvar * logvar_sd + logvar_mu  # (N,)

    def lp(x, loc, scale):
        return -0.5 * ((x - loc) / scale) ** 2 - jnp.log(scale) - _LOG_SQRT_2PI

    penalty = lp(mu, mu_mu, mu_sd) + lp(logvar, logvar_mu, logvar_sd)  # (N,)
    sd = jnp.exp(0.5 * logvar)
    lls = lp(y[None, :], mu[:, None], sd[:, None]).sum(axis=-1)        # (N,)
    return -lls.mean() + penalty.mean()


if __name__ == "__main__":
    key = jax.random.PRNGKey(0)
    k_y, k_mu, k_lv = jax.random.split(key, 3)

    n_sample = 200   # small stand-in for the default 5000; not a multiple of
                     # 128 so the lane-padding/masking path is exercised
    d = 16           # length of the observed vector y

    # torch init is zeros(4); perturb slightly so the exp/scale paths are
    # exercised non-trivially but deterministically.
    param = jnp.array([0.1, -0.2, 0.05, -0.1], dtype=jnp.float32)

    y = jax.random.normal(k_y, (d,), dtype=jnp.float32)
    eps_mu = jax.random.normal(k_mu, (n_sample,), dtype=jnp.float32)
    eps_logvar = jax.random.normal(k_lv, (n_sample,), dtype=jnp.float32)

    out = model_forward(param, y, eps_mu, eps_logvar)
    out = jax.block_until_ready(out)

    ref = _reference(param, y, eps_mu, eps_logvar)
    assert jnp.allclose(out, ref, rtol=1e-4, atol=1e-4), (out, ref)

    print("KERNEL_OK")
</pallas_src>

<mosaic_0001>
module attributes {stable_mosaic.version = 11 : i64} {
  func.func @_elbo_kernel(%arg0: memref<4xf32, #tpu.memory_space<smem>>, %arg1: memref<1x16xf32, #tpu.memory_space<vmem>>, %arg2: memref<2x128xf32, #tpu.memory_space<vmem>>, %arg3: memref<2x128xf32, #tpu.memory_space<vmem>>, %arg4: memref<1x1xf32, #tpu.memory_space<smem>>) attributes {dimension_semantics = [], scalar_prefetch = 0 : i64, scratch_operands = 0 : i64, tpu.core_type = #tpu.core_type<tc>} {
    %c0 = arith.constant 0 : index
    %0 = memref.load %arg0[%c0] : memref<4xf32, #tpu.memory_space<smem>>
    %c1 = arith.constant 1 : index
    %1 = memref.load %arg0[%c1] : memref<4xf32, #tpu.memory_space<smem>>
    %c2 = arith.constant 2 : index
    %2 = memref.load %arg0[%c2] : memref<4xf32, #tpu.memory_space<smem>>
    %c3 = arith.constant 3 : index
    %3 = memref.load %arg0[%c3] : memref<4xf32, #tpu.memory_space<smem>>
    %cst = arith.constant 5.000000e-01 : f32
    %4 = arith.mulf %cst, %1 : f32
    %5 = math.exp %4 : f32
    %cst_0 = arith.constant 5.000000e-01 : f32
    %6 = arith.mulf %cst_0, %3 : f32
    %7 = math.exp %6 : f32
    %c0_1 = arith.constant 0 : index
    %c0_2 = arith.constant 0 : index
    %8 = vector.load %arg1[%c0_1, %c0_2] : memref<1x16xf32, #tpu.memory_space<vmem>>, vector<1x16xf32>
    %9 = vector.shape_cast %8 : vector<1x16xf32> to vector<1x1x16xf32>
    %cst_3 = arith.constant dense<0.000000e+00> : vector<1xf32>
    %10 = vector.multi_reduction <add>, %9, %cst_3 [1, 2] : vector<1x1x16xf32> to vector<1xf32>
    %11 = vector.shape_cast %10 : vector<1xf32> to vector<1x1x1xf32>
    %12 = vector.extract %11[0, 0, 0] : f32 from vector<1x1x1xf32>
    %13 = arith.mulf %8, %8 : vector<1x16xf32>
    %14 = vector.shape_cast %13 : vector<1x16xf32> to vector<1x1x16xf32>
    %cst_4 = arith.constant dense<0.000000e+00> : vector<1xf32>
    %15 = vector.multi_reduction <add>, %14, %cst_4 [1, 2] : vector<1x1x16xf32> to vector<1xf32>
    %16 = vector.shape_cast %15 : vector<1xf32> to vector<1x1x1xf32>
    %17 = vector.extract %16[0, 0, 0] : f32 from vector<1x1x1xf32>
    %c0_5 = arith.constant 0 : index
    %c0_6 = arith.constant 0 : index
    %18 = vector.load %arg2[%c0_5, %c0_6] : memref<2x128xf32, #tpu.memory_space<vmem>>, vector<2x128xf32>
    %c0_7 = arith.constant 0 : index
    %c0_8 = arith.constant 0 : index
    %19 = vector.load %arg3[%c0_7, %c0_8] : memref<2x128xf32, #tpu.memory_space<vmem>>, vector<2x128xf32>
    %20 = vector.broadcast %5 : f32 to vector<2x128xf32>
    %21 = arith.mulf %18, %20 : vector<2x128xf32>
    %22 = vector.broadcast %0 : f32 to vector<2x128xf32>
    %23 = arith.addf %21, %22 : vector<2x128xf32>
    %24 = vector.broadcast %7 : f32 to vector<2x128xf32>
    %25 = arith.mulf %19, %24 : vector<2x128xf32>
    %26 = vector.broadcast %2 : f32 to vector<2x128xf32>
    %27 = arith.addf %25, %26 : vector<2x128xf32>
    %cst_9 = arith.constant 0.000000e+00 : f32
    %28 = vector.broadcast %cst_9 : f32 to vector<2x128xf32>
    %29 = arith.subf %28, %27 : vector<2x128xf32>
    %30 = math.exp %29 : vector<2x128xf32>
    %cst_10 = arith.constant 1.600000e+01 : f32
    %31 = vector.broadcast %cst_10 : f32 to vector<2x128xf32>
    %32 = arith.mulf %31, %23 : vector<2x128xf32>
    %cst_11 = arith.constant 2.000000e+00 : f32
    %33 = arith.mulf %cst_11, %12 : f32
    %34 = vector.broadcast %33 : f32 to vector<2x128xf32>
    %35 = arith.subf %32, %34 : vector<2x128xf32>
    %36 = arith.mulf %23, %35 : vector<2x128xf32>
    %37 = vector.broadcast %17 : f32 to vector<2x128xf32>
    %38 = arith.addf %37, %36 : vector<2x128xf32>
    %39 = arith.mulf %18, %18 : vector<2x128xf32>
    %40 = arith.mulf %19, %19 : vector<2x128xf32>
    %41 = arith.addf %39, %40 : vector<2x128xf32>
    %cst_12 = arith.constant -5.000000e-01 : f32
    %42 = vector.broadcast %cst_12 : f32 to vector<2x128xf32>
    %43 = arith.mulf %42, %41 : vector<2x128xf32>
    %cst_13 = arith.constant 5.000000e-01 : f32
    %44 = vector.broadcast %cst_13 : f32 to vector<2x128xf32>
    %45 = arith.mulf %44, %30 : vector<2x128xf32>
    %46 = arith.mulf %45, %38 : vector<2x128xf32>
    %47 = arith.addf %43, %46 : vector<2x128xf32>
    %cst_14 = arith.constant 8.000000e+00 : f32
    %48 = vector.broadcast %cst_14 : f32 to vector<2x128xf32>
    %49 = arith.mulf %48, %27 : vector<2x128xf32>
    %50 = arith.addf %47, %49 : vector<2x128xf32>
    %51 = tpu.iota {dimensions = array<i32: 0>} : vector<2x128xi32>
    %52 = tpu.iota {dimensions = array<i32: 1>} : vector<2x128xi32>
    %c128_i32 = arith.constant 128 : i32
    %53 = vector.broadcast %c128_i32 : i32 to vector<2x128xi32>
    %54 = arith.muli %51, %53 : vector<2x128xi32>
    %55 = arith.addi %54, %52 : vector<2x128xi32>
    %c200_i32 = arith.constant 200 : i32
    %56 = vector.broadcast %c200_i32 : i32 to vector<2x128xi32>
    %57 = arith.cmpi slt, %55, %56 : vector<2x128xi32>
    %cst_15 = arith.constant 0.000000e+00 : f32
    %58 = vector.broadcast %cst_15 : f32 to vector<2x128xf32>
    %59 = arith.select %57, %50, %58 : vector<2x128xi1>, vector<2x128xf32>
    %60 = vector.shape_cast %59 : vector<2x128xf32> to vector<1x2x128xf32>
    %cst_16 = arith.constant dense<0.000000e+00> : vector<1xf32>
    %61 = vector.multi_reduction <add>, %60, %cst_16 [1, 2] : vector<1x2x128xf32> to vector<1xf32>
    %62 = vector.shape_cast %61 : vector<1xf32> to vector<1x1x1xf32>
    %63 = vector.extract %62[0, 0, 0] : f32 from vector<1x1x1xf32>
    %cst_17 = arith.constant -5.000000e-01 : f32
    %64 = arith.mulf %cst_17, %1 : f32
    %cst_18 = arith.constant 5.000000e-01 : f32
    %65 = arith.mulf %cst_18, %3 : f32
    %66 = arith.subf %64, %65 : f32
    %cst_19 = arith.constant 12.865139 : f32
    %67 = arith.addf %66, %cst_19 : f32
    %cst_20 = arith.constant 5.000000e-03 : f32
    %68 = arith.mulf %63, %cst_20 : f32
    %69 = arith.addf %68, %67 : f32
    %c0_21 = arith.constant 0 : index
    %c0_22 = arith.constant 0 : index
    %70 = memref.load %arg4[%c0_21, %c0_22] : memref<1x1xf32, #tpu.memory_space<smem>>
    memref.store %69, %arg4[%c0_21, %c0_22] : memref<1x1xf32, #tpu.memory_space<smem>>
    return
  }
}

</mosaic_0001>

<llo_original>
// kernel: tpu_custom_call.1
$region0: #{tpu_custom_call.1}
  #allocation0 [shape = 'u32[]', space=smem, size = 0x4, offset = 0x4, fixed_abs, tag = 'smem constant byte address 0x4 - core index']
  #allocation1 [shape = 'u32[144,128]{1,0:T(1,128)}', space=vmem, size = 0x12000, scoped, tag = 'internal scratch']
  %s0 = inlined_call_operand.hbm [shape: f32[4], index: 0, kind: input, shape index: {}]
  %s1 = inlined_call_operand.vmem [shape: f32[1,16], index: 1, kind: input, shape index: {}]
  %s2 = inlined_call_operand.vmem [shape: f32[2,128], index: 2, kind: input, shape index: {}]
  %s3 = inlined_call_operand.vmem [shape: f32[2,128], index: 3, kind: input, shape index: {}]
  %s4 = inlined_call_operand.hbm [shape: f32[1,1], index: 4, kind: output, shape index: {}]
  %s5 = sld [smem:[#allocation0]]
  $region30: #{tpu_custom_call.1} parent=0
    _
  %s7 = ssub.s32 1, %s5
  %s8 = scalar_select 0, %s7, %s5
  $region1: #{tpu_custom_call.1} parent=0
    #allocation2 [shape = 'u8[512]{0}', space=smem, size = 0x200, scoped, tag = 'input window, operand 0, single buffered']
    #allocation3 [shape = 's32[1]{0}', space=sflag, size = 0x4, scoped, tag = 'scoped memory for tpu_custom_call.1']
    #allocation4 [shape = 's32[1]{0}', space=sflag, size = 0x4, scoped, tag = 'scoped memory for tpu_custom_call.1']
    #allocation5 [shape = 'u8[512]{0}', space=smem, size = 0x200, scoped, tag = 'output window, operand 0, single buffered']
    %9 = vsyncpa [#allocation3], 0
    %10 = vsyncpa [#allocation4], 0
    // Predicated region
    $region2: #{tpu_custom_call.1} parent=1 // pred_check
      _
    $region3: #{tpu_custom_call.1} parent=1 // pred_check_branch
      %12 = sbr.rel (0) target = $region5
    $region4: #{tpu_custom_call.1} parent=1 // pred_region
      %s14 = ssub.s32 16, 16
      %15 = vsyncadd [#allocation3], %s14
      %18 = dma.hbm_to_smem %s0, 16, [#allocation2], [#allocation3]
    $region5: #{tpu_custom_call.1} parent=1 // pred_fallthru
      _
    // Predicated region
    $region6: #{tpu_custom_call.1} parent=1 // pred_check
      _
    $region7: #{tpu_custom_call.1} parent=1 // pred_check_branch
      %20 = sbr.rel (0) target = $region9
    $region8: #{tpu_custom_call.1} parent=1 // pred_region
      _
    $region9: #{tpu_custom_call.1} parent=1 // pred_fallthru
      _
    // Predicated region
    $region10: #{tpu_custom_call.1} parent=1 // pred_check
      _
    $region11: #{tpu_custom_call.1} parent=1 // pred_check_branch
      %22 = sbr.rel (0) target = $region13
    $region12: #{tpu_custom_call.1} parent=1 // pred_region
      _
    $region13: #{tpu_custom_call.1} parent=1 // pred_fallthru
      _
    // Predicated region
    $region14: #{tpu_custom_call.1} parent=1 // pred_check
      _
    $region15: #{tpu_custom_call.1} parent=1 // pred_check_branch
      %24 = sbr.rel (0) target = $region17
    $region16: #{tpu_custom_call.1} parent=1 // pred_region
      _
    $region17: #{tpu_custom_call.1} parent=1 // pred_fallthru
      _
    // Predicated region
    $region18: #{tpu_custom_call.1} parent=1 // pred_check
      _
    $region19: #{tpu_custom_call.1} parent=1 // pred_check_branch
      %26 = sbr.rel (0) target = $region21
    $region20: #{tpu_custom_call.1} parent=1 // pred_region
      %27 = dma.done [#allocation3], 16
    $region21: #{tpu_custom_call.1} parent=1 // pred_fallthru
      _
    %28 = sfence
    %s29 = sld [smem:[#allocation2]]
    %s30 = sld [smem:[#allocation2 + $0x1]]
    %s31 = sld [smem:[#allocation2 + $0x2]]
    %s32 = sld [smem:[#allocation2 + $0x3]]
    %s33 = smul.f32 %s30, 0.5
    %v34 = vstv %s33
    %v35 = vmul.f32 %v34, 1.442695
    %v36 = vpow.pop %v35
    %s37 = vtos %v36
    %s38 = smul.f32 %s32, 0.5
    %v39 = vstv %s38
    %v40 = vmul.f32 %v39, 1.442695
    %v41 = vpow.pop %v40
    %s42 = vtos %v41
    %v43 = vld [vmem:[%s1] sm:$0x1]
    %vm44 = vcmask 122880
    %v45 = vsel %vm44, %v43, 0.0
    %46 = vadd.xlane.f32.xlu0 %v45
    %v47 = vpop.xlane.xlu0 %46
    %v48 = vrot.slane %v47, 4
    %v49 = vadd.f32 %v47, %v48
    %v50 = vrot.slane %v49, 2
    %v51 = vadd.f32 %v49, %v50
    %v52 = vrot.slane %v51, 1
    %v53 = vadd.f32 %v51, %v52
    %s54 = vtos %v53
    %v55 = vmul.f32 %v43, %v43
    %v56 = vsel %vm44, %v55, 0.0
    %57 = vadd.xlane.f32.xlu0 %v56
    %v58 = vpop.xlane.xlu0 %57
    %v59 = vrot.slane %v58, 4
    %v60 = vadd.f32 %v58, %v59
    %v61 = vrot.slane %v60, 2
    %v62 = vadd.f32 %v60, %v61
    %v63 = vrot.slane %v62, 1
    %v64 = vadd.f32 %v62, %v63
    %s65 = vtos %v64
    %v66 = vld [vmem:[%s2] sm:$0x3]
    %v67 = vld [vmem:[%s3] sm:$0x3]
    %v68 = vstv %s37
    %v69 = vmul.f32 %v66, %v68
    %v70 = vstv %s29
    %v71 = vadd.f32 %v69, %v70
    %v72 = vstv %s42
    %v73 = vmul.f32 %v67, %v72
    %v74 = vstv %s31
    %v75 = vadd.f32 %v73, %v74
    %v76 = vsub.f32 0.0, %v75
    %v77 = vmul.f32 %v76, 1.442695
    %v78 = vpow.pop %v77
    %v79 = vmul.f32 %v71, 16.0
    %s80 = smul.f32 %s54, 2.0
    %v81 = vstv %s80
    %v82 = vsub.f32 %v79, %v81
    %v83 = vmul.f32 %v71, %v82
    %v84 = vstv %s65
    %v85 = vadd.f32 %v84, %v83
    %v86 = vmul.f32 %v66, %v66
    %v87 = vmul.f32 %v67, %v67
    %v88 = vadd.f32 %v86, %v87
    %v89 = vmul.f32 %v88, -0.5
    %v90 = vmul.f32 %v78, 0.5
    %v91 = vmul.f32 %v90, %v85
    %v92 = vadd.f32 %v89, %v91
    %v93 = vmul.f32 %v75, 8.0
    %v94 = vadd.f32 %v92, %v93
    %v95 = vlaneseq
    %v96 = vshrl.u32 %v95, 7
    %v97 = vlaneseq
    %v98 = vand.u32 %v97, 127
    %v99 = vmul.u32 %v96, 128
    %v100 = vadd.s32 %v99, %v98
    %vm101 = vcmp.lt.s32.totalorder %v100, 200
    %v102 = vsel %vm101, %v94, 0.0
    %vm103 = vcmask 1041408
    %v104 = vsel %vm103, %v102, 0.0
    %105 = vadd.xlane.f32.xlu0 %v104
    %v106 = vpop.xlane.xlu0 %105
    %v107 = vrot.slane %v106, 4
    %v108 = vadd.f32 %v106, %v107
    %v109 = vrot.slane %v108, 2
    %v110 = vadd.f32 %v108, %v109
    %v111 = vrot.slane %v110, 1
    %v112 = vadd.f32 %v110, %v111
    %s113 = vtos %v112
    %s114 = smul.f32 %s30, -0.5
    %s115 = ssub.f32 %s114, %s38
    %s116 = sadd.f32 %s115, 12.865139
    %s117 = smul.f32 %s113, 0.005
    %s118 = sadd.f32 %s117, %s116
    %s119 = scalar_lea.smem [#allocation5], 0
    %120 = sst [smem:[%s119]] %s118
    // Predicated region
    $region22: #{tpu_custom_call.1} parent=1 // pred_check
      _
    $region23: #{tpu_custom_call.1} parent=1 // pred_check_branch
      %122 = sbr.rel (0) target = $region25
    $region24: #{tpu_custom_call.1} parent=1 // pred_region
      %s124 = ssub.s32 16, 16
      %125 = vsyncadd [#allocation4], %s124
      %128 = dma.smem_to_hbm [#allocation5], 16, %s4, [#allocation4]
    $region25: #{tpu_custom_call.1} parent=1 // pred_fallthru
      _
    // Predicated region
    $region26: #{tpu_custom_call.1} parent=1 // pred_check
      _
    $region27: #{tpu_custom_call.1} parent=1 // pred_check_branch
      %130 = sbr.rel (0) target = $region29
    $region28: #{tpu_custom_call.1} parent=1 // pred_region
      %131 = dma.done [#allocation4], 16
    $region29: #{tpu_custom_call.1} parent=1 // pred_fallthru
      _
    %132 = sfence
    %133 = vsyncpa [#allocation3], 1
    %134 = vsyncpa [#allocation4], 1

</llo_original>
